<compile_context>
chip_gen: v7x
topology: tpu7x:2x2x1
jax: 0.10.0
libtpu: 0.0.40
codegen_flags: <defaults>
</compile_context>

<pallas_src>
import functools

import jax
import jax.numpy as jnp
from jax.experimental import pallas as pl
from jax.experimental.pallas import tpu as pltpu

LANE = 128            # pad fan_out dims to this for unmasked lane-dense stores
SUBLANE = 8           # batch tiles rounded to this (f32/bf16-safe sublane unit)
MAX_TILE_B = 2048     # ~5-6 MiB/tile: amortizes grid-step overhead, fits v5e VMEM
MEGACORE_MIN_ROWS = 1024  # split into >=2 tiles above this so v7x megacore engages


def _round_up(n, m):
    return ((n + m - 1) // m) * m


def _act_dtype_for_device():
    """bf16 tanh on v6e/v7x (bf16 VPU/EUP); f32 on v5e and older."""
    kind = jax.devices()[0].device_kind.lower()
    if "v6" in kind or "v7" in kind:
        return jnp.bfloat16
    return jnp.float32


def _mlp_policy_kernel(x_ref, w1_ref, b1_ref, w2_ref, b2_ref, w3_ref, b3_ref,
                       out_ref, *, act_dtype):
    """Fused 3-layer MLP on one (tile_b, obs_dim) batch tile.

    MXU matmuls take bf16 inputs with f32 accumulation. Bias add is f32; tanh
    runs in `act_dtype` (bf16 on v6e/v7x, f32 on v5e). Feature widths are
    pre-padded to 128-lane multiples so the final store is lane-dense.
    """
    # Hoist the (1, fan_out) bias reads once per tile.
    b1 = b1_ref[...]
    b2 = b2_ref[...]
    b3 = b3_ref[...]

    x = x_ref[...]
    if x.dtype != jnp.bfloat16:   # fast path: producer already hands us bf16
        x = x.astype(jnp.bfloat16)

    h1 = jnp.tanh(
        (jnp.dot(x, w1_ref[...], preferred_element_type=jnp.float32)
         + b1).astype(act_dtype))
    h2 = jnp.tanh(
        (jnp.dot(h1.astype(jnp.bfloat16), w2_ref[...],
                 preferred_element_type=jnp.float32)
         + b2).astype(act_dtype))
    logits = (
        jnp.dot(h2.astype(jnp.bfloat16), w3_ref[...],
                preferred_element_type=jnp.float32) + b3)
    out_ref[...] = logits.astype(out_ref.dtype)


def prepare_params(params):
    """Pad fan_out dims to 128-lane multiples and cast weights to bf16.

    Padded bias entries are zero, so padded hidden columns are tanh(0) = 0 and
    padded logit columns are exactly 0. Call once at init, not per forward.
    """
    w1, b1 = params["w1"], params["b1"]
    w2, b2 = params["w2"], params["b2"]
    w3, b3 = params["w3"], params["b3"]

    h1, h2, a = w1.shape[1], w2.shape[1], w3.shape[1]
    h1p, h2p, ap = _round_up(h1, LANE), _round_up(h2, LANE), _round_up(a, LANE)

    def pad2(m, rows, cols):
        return jnp.pad(m, ((0, rows - m.shape[0]), (0, cols - m.shape[1])))

    return {
        "w1": pad2(w1, w1.shape[0], h1p).astype(jnp.bfloat16),
        "b1": pad2(b1, 1, h1p).astype(jnp.float32),
        "w2": pad2(w2, h1p, h2p).astype(jnp.bfloat16),
        "b2": pad2(b2, 1, h2p).astype(jnp.float32),
        "w3": pad2(w3, h2p, ap).astype(jnp.bfloat16),
        "b3": pad2(b3, 1, ap).astype(jnp.float32),
        "action_dim": a,
    }


def discrete_policy_forward(obs, prepared, *, out_dtype=jnp.bfloat16,
                            max_tile_b=MAX_TILE_B, act_dtype=None):
    """DiscretePolicy forward: batch-tiled fused Pallas MLP.

    obs:      (B, obs_dim), ideally bf16 (cast at the producer); f32 accepted.
    prepared: output of prepare_params().
    Returns (B, round_up(action_dim, 128)) logits in `out_dtype`. Only the
    first prepared["action_dim"] columns are valid (rest are exactly 0);
    consumers must slice/mask them out before softmax/argmax/sampling.
    """
    w1, b1 = prepared["w1"], prepared["b1"]
    w2, b2 = prepared["w2"], prepared["b2"]
    w3, b3 = prepared["w3"], prepared["b3"]

    B, obs_dim = obs.shape
    a_pad = w3.shape[1]

    if act_dtype is None:
        act_dtype = _act_dtype_for_device()

    # Balanced batch tiling: keeps tiles large (amortize per-step overhead),
    # bounds last-tile overrun to < 8*n_tiles rows, and forces >=2 tiles for
    # medium/large B so v7x megacore splits the work across both TensorCores.
    n_tiles = pl.cdiv(B, max_tile_b)
    if B >= MEGACORE_MIN_ROWS and n_tiles < 2:
        n_tiles = 2
    if n_tiles == 1:
        tile_b = B                 # block == full batch dim: always legal, exact
    else:
        tile_b = _round_up(pl.cdiv(B, n_tiles), SUBLANE)
    grid = (pl.cdiv(B, tile_b),)

    # No jnp.pad of obs and no output slice: the ragged last tile is handled by
    # Pallas (garbage OOB rows only produce garbage OOB output rows, whose
    # writes are dropped).
    const = lambda arr: pl.BlockSpec(arr.shape, lambda i: (0,) * arr.ndim)

    kernel = functools.partial(_mlp_policy_kernel, act_dtype=act_dtype)
    out = pl.pallas_call(
        kernel,
        out_shape=jax.ShapeDtypeStruct((B, a_pad), out_dtype),
        grid=grid,
        in_specs=[
            pl.BlockSpec((tile_b, obs_dim), lambda i: (i, 0)),  # obs: batch-tiled
            const(w1), const(b1),
            const(w2), const(b2),
            const(w3), const(b3),
        ],
        out_specs=pl.BlockSpec((tile_b, a_pad), lambda i: (i, 0)),
        compiler_params=pltpu.CompilerParams(
            dimension_semantics=("parallel",)),   # megacore split on v7x
    )(obs, w1, b1, w2, b2, w3, b3)
    return out


def init_params(key, obs_dim, hidden_sizes, action_dim):
    """Deterministic init mimicking torch.nn.Linear default U(-1/sqrt(fan_in), +)."""
    sizes = [obs_dim, *hidden_sizes, action_dim]
    params = {}
    for i, (fan_in, fan_out) in enumerate(zip(sizes[:-1], sizes[1:]), start=1):
        key, kw, kb = jax.random.split(key, 3)
        bound = 1.0 / jnp.sqrt(fan_in)
        params[f"w{i}"] = jax.random.uniform(
            kw, (fan_in, fan_out), jnp.float32, -bound, bound)
        params[f"b{i}"] = jax.random.uniform(
            kb, (1, fan_out), jnp.float32, -bound, bound)
    return params


def _reference_forward(obs, params):
    h = jnp.tanh(obs @ params["w1"] + params["b1"])
    h = jnp.tanh(h @ params["w2"] + params["b2"])
    return h @ params["w3"] + params["b3"]  # identity output activation


if __name__ == "__main__":
    obs_dim, hidden_sizes, action_dim = 16, [32, 32], 8

    key = jax.random.PRNGKey(0)
    key, k_obs1, k_obs2 = jax.random.split(key, 3)
    params = init_params(key, obs_dim, hidden_sizes, action_dim)
    prepared = prepare_params(params)
    a_pad = prepared["w3"].shape[1]

    # Case 1: single exact tile (B = 8).
    obs_f32 = jax.random.normal(k_obs1, (8, obs_dim), jnp.float32)
    obs_bf16 = obs_f32.astype(jnp.bfloat16)   # producer-side cast: stream bf16 obs
    logits = discrete_policy_forward(obs_bf16, prepared)
    jax.block_until_ready(logits)
    assert logits.shape == (8, a_pad)
    got = logits[:, :action_dim].astype(jnp.float32)
    ref = _reference_forward(obs_f32, params)
    # bf16 obs/weights/output (f32 accumulation) => ~1e-2-level error vs f32 ref.
    assert jnp.allclose(got, ref, atol=5e-2, rtol=5e-2), (
        float(jnp.max(jnp.abs(got - ref))))

    # Case 2: multi-tile grid with a ragged last tile (B = 20, tile_b = 8),
    # exercising Pallas' OOB-masked final-block writes (no jnp.pad, no slice).
    obs_f32 = jax.random.normal(k_obs2, (20, obs_dim), jnp.float32)
    obs_bf16 = obs_f32.astype(jnp.bfloat16)
    logits = discrete_policy_forward(obs_bf16, prepared, max_tile_b=8)
    jax.block_until_ready(logits)
    assert logits.shape == (20, a_pad)
    got = logits[:, :action_dim].astype(jnp.float32)
    ref = _reference_forward(obs_f32, params)
    assert jnp.allclose(got, ref, atol=5e-2, rtol=5e-2), (
        float(jnp.max(jnp.abs(got - ref))))

    print("KERNEL_OK")
</pallas_src>

<mosaic_0001>
module attributes {stable_mosaic.version = 11 : i64} {
  func.func @_mlp_policy_kernel(%arg0: i32, %arg1: memref<8x16xbf16, #tpu.memory_space<vmem>>, %arg2: memref<16x128xbf16, #tpu.memory_space<vmem>>, %arg3: memref<1x128xf32, #tpu.memory_space<vmem>>, %arg4: memref<128x128xbf16, #tpu.memory_space<vmem>>, %arg5: memref<1x128xf32, #tpu.memory_space<vmem>>, %arg6: memref<128x128xbf16, #tpu.memory_space<vmem>>, %arg7: memref<1x128xf32, #tpu.memory_space<vmem>>, %arg8: memref<8x128xbf16, #tpu.memory_space<vmem>>) attributes {dimension_semantics = [#tpu.dimension_semantics<parallel>], iteration_bounds = array<i64: 1>, scalar_prefetch = 0 : i64, scratch_operands = 0 : i64, tpu.core_type = #tpu.core_type<tc>, window_params = [{transform_indices = @transform_0, window_bounds = array<i64: 8, 16>}, {pipeline_mode = #tpu.pipeline_mode<synchronous>, transform_indices = @transform_1, window_bounds = array<i64: 16, 128>}, {pipeline_mode = #tpu.pipeline_mode<synchronous>, transform_indices = @transform_2, window_bounds = array<i64: 1, 128>}, {pipeline_mode = #tpu.pipeline_mode<synchronous>, transform_indices = @transform_3, window_bounds = array<i64: 128, 128>}, {pipeline_mode = #tpu.pipeline_mode<synchronous>, transform_indices = @transform_4, window_bounds = array<i64: 1, 128>}, {pipeline_mode = #tpu.pipeline_mode<synchronous>, transform_indices = @transform_5, window_bounds = array<i64: 128, 128>}, {pipeline_mode = #tpu.pipeline_mode<synchronous>, transform_indices = @transform_6, window_bounds = array<i64: 1, 128>}, {transform_indices = @transform_7, window_bounds = array<i64: 8, 128>}]} {
    %c0 = arith.constant 0 : index
    %c0_0 = arith.constant 0 : index
    %0 = vector.load %arg3[%c0, %c0_0] : memref<1x128xf32, #tpu.memory_space<vmem>>, vector<1x128xf32>
    %c0_1 = arith.constant 0 : index
    %c0_2 = arith.constant 0 : index
    %1 = vector.load %arg5[%c0_1, %c0_2] : memref<1x128xf32, #tpu.memory_space<vmem>>, vector<1x128xf32>
    %c0_3 = arith.constant 0 : index
    %c0_4 = arith.constant 0 : index
    %2 = vector.load %arg7[%c0_3, %c0_4] : memref<1x128xf32, #tpu.memory_space<vmem>>, vector<1x128xf32>
    %c0_5 = arith.constant 0 : index
    %c0_6 = arith.constant 0 : index
    %3 = vector.load %arg1[%c0_5, %c0_6] : memref<8x16xbf16, #tpu.memory_space<vmem>>, vector<8x16xbf16>
    %c0_7 = arith.constant 0 : index
    %c0_8 = arith.constant 0 : index
    %4 = vector.load %arg2[%c0_7, %c0_8] : memref<16x128xbf16, #tpu.memory_space<vmem>>, vector<16x128xbf16>
    %cst = arith.constant dense<0.000000e+00> : vector<8x128xf32>
    %5 = tpu.matmul %3, %4, %cst {dimension_numbers = #tpu.dot_dimension_numbers<[1], [0], [0], [1], [0, 0, 1, 1], [], []>} : vector<8x16xbf16>, vector<16x128xbf16>, vector<8x128xf32> -> vector<8x128xf32>
    %6 = vector.broadcast %0 : vector<1x128xf32> to vector<8x128xf32>
    %7 = arith.addf %5, %6 : vector<8x128xf32>
    %8 = math.tanh %7 : vector<8x128xf32>
    %9 = arith.truncf %8 : vector<8x128xf32> to vector<8x128xbf16>
    %c0_9 = arith.constant 0 : index
    %c0_10 = arith.constant 0 : index
    %10 = vector.load %arg4[%c0_9, %c0_10] : memref<128x128xbf16, #tpu.memory_space<vmem>>, vector<128x128xbf16>
    %cst_11 = arith.constant dense<0.000000e+00> : vector<8x128xf32>
    %11 = tpu.matmul %9, %10, %cst_11 {dimension_numbers = #tpu.dot_dimension_numbers<[1], [0], [0], [1], [0, 0, 1, 1], [], []>} : vector<8x128xbf16>, vector<128x128xbf16>, vector<8x128xf32> -> vector<8x128xf32>
    %12 = vector.broadcast %1 : vector<1x128xf32> to vector<8x128xf32>
    %13 = arith.addf %11, %12 : vector<8x128xf32>
    %14 = math.tanh %13 : vector<8x128xf32>
    %15 = arith.truncf %14 : vector<8x128xf32> to vector<8x128xbf16>
    %c0_12 = arith.constant 0 : index
    %c0_13 = arith.constant 0 : index
    %16 = vector.load %arg6[%c0_12, %c0_13] : memref<128x128xbf16, #tpu.memory_space<vmem>>, vector<128x128xbf16>
    %cst_14 = arith.constant dense<0.000000e+00> : vector<8x128xf32>
    %17 = tpu.matmul %15, %16, %cst_14 {dimension_numbers = #tpu.dot_dimension_numbers<[1], [0], [0], [1], [0, 0, 1, 1], [], []>} : vector<8x128xbf16>, vector<128x128xbf16>, vector<8x128xf32> -> vector<8x128xf32>
    %18 = vector.broadcast %2 : vector<1x128xf32> to vector<8x128xf32>
    %19 = arith.addf %17, %18 : vector<8x128xf32>
    %20 = arith.truncf %19 : vector<8x128xf32> to vector<8x128xbf16>
    %c0_15 = arith.constant 0 : index
    %c0_16 = arith.constant 0 : index
    %21 = vector.load %arg8[%c0_15, %c0_16] : memref<8x128xbf16, #tpu.memory_space<vmem>>, vector<8x128xbf16>
    tpu.vector_store %arg8[%c0_15, %c0_16], %20 {strides = array<i32>} : memref<8x128xbf16, #tpu.memory_space<vmem>>, vector<8x128xbf16>,
    return
  }
  func.func @transform_0(%arg0: i32) -> (i32, i32) {
    %c0_i32 = arith.constant 0 : i32
    %c0_i32_0 = arith.constant 0 : i32
    return %arg0, %c0_i32 : i32, i32
  }
  func.func @transform_1(%arg0: i32) -> (i32, i32) {
    %c0_i32 = arith.constant 0 : i32
    %c0_i32_0 = arith.constant 0 : i32
    %c0_i32_1 = arith.constant 0 : i32
    return %c0_i32, %c0_i32_0 : i32, i32
  }
  func.func @transform_2(%arg0: i32) -> (i32, i32) {
    %c0_i32 = arith.constant 0 : i32
    %c0_i32_0 = arith.constant 0 : i32
    %c0_i32_1 = arith.constant 0 : i32
    return %c0_i32, %c0_i32_0 : i32, i32
  }
  func.func @transform_3(%arg0: i32) -> (i32, i32) {
    %c0_i32 = arith.constant 0 : i32
    %c0_i32_0 = arith.constant 0 : i32
    %c0_i32_1 = arith.constant 0 : i32
    return %c0_i32, %c0_i32_0 : i32, i32
  }
  func.func @transform_4(%arg0: i32) -> (i32, i32) {
    %c0_i32 = arith.constant 0 : i32
    %c0_i32_0 = arith.constant 0 : i32
    %c0_i32_1 = arith.constant 0 : i32
    return %c0_i32, %c0_i32_0 : i32, i32
  }
  func.func @transform_5(%arg0: i32) -> (i32, i32) {
    %c0_i32 = arith.constant 0 : i32
    %c0_i32_0 = arith.constant 0 : i32
    %c0_i32_1 = arith.constant 0 : i32
    return %c0_i32, %c0_i32_0 : i32, i32
  }
  func.func @transform_6(%arg0: i32) -> (i32, i32) {
    %c0_i32 = arith.constant 0 : i32
    %c0_i32_0 = arith.constant 0 : i32
    %c0_i32_1 = arith.constant 0 : i32
    return %c0_i32, %c0_i32_0 : i32, i32
  }
  func.func @transform_7(%arg0: i32) -> (i32, i32) {
    %c0_i32 = arith.constant 0 : i32
    %c0_i32_0 = arith.constant 0 : i32
    return %arg0, %c0_i32 : i32, i32
  }
}

</mosaic_0001>

<llo_original>
// kernel: tpu_custom_call.1
$region0: #{tpu_custom_call.1}
  #allocation0 [shape = 'u32[]', space=smem, size = 0x4, offset = 0x4, fixed_abs, tag = 'smem constant byte address 0x4 - core index']
  #allocation1 [shape = 'u32[144,128]{1,0:T(1,128)}', space=vmem, size = 0x12000, scoped, tag = 'internal scratch']
  %s0 = inlined_call_operand.hbm [shape: bf16[8,16], index: 0, kind: input, shape index: {}]
  %s1 = inlined_call_operand.hbm [shape: bf16[16,128], index: 1, kind: input, shape index: {}]
  %s2 = inlined_call_operand.vmem [shape: f32[1,128], index: 2, kind: input, shape index: {}]
  %s3 = inlined_call_operand.hbm [shape: bf16[128,128], index: 3, kind: input, shape index: {}]
  %s4 = inlined_call_operand.vmem [shape: f32[1,128], index: 4, kind: input, shape index: {}]
  %s5 = inlined_call_operand.hbm [shape: bf16[128,128], index: 5, kind: input, shape index: {}]
  %s6 = inlined_call_operand.vmem [shape: f32[1,128], index: 6, kind: input, shape index: {}]
  %s7 = inlined_call_operand.hbm [shape: bf16[8,128], index: 7, kind: output, shape index: {}]
  %s8 = sld [smem:[#allocation0]]
  $region54: #{tpu_custom_call.1} parent=0
    _
  %s10 = ssub.s32 1, %s8
  %s11 = scalar_select 0, %s10, %s8
  $region1: #{tpu_custom_call.1} parent=0
    #allocation2 [shape = 'u8[2048]{0}', space=vmem, size = 0x800, scoped, tag = 'input window, operand 0, single buffered']
    #allocation3 [shape = 's32[1]{0}', space=sflag, size = 0x4, scoped, tag = 'scoped memory for tpu_custom_call.1']
    #allocation4 [shape = 's32[1]{0}', space=sflag, size = 0x4, scoped, tag = 'scoped memory for tpu_custom_call.1']
    #allocation5 [shape = 'u8[4096]{0}', space=vmem, size = 0x1000, scoped, tag = 'input window, operand 1, single buffered']
    #allocation6 [shape = 's32[1]{0}', space=sflag, size = 0x4, scoped, tag = 'scoped memory for tpu_custom_call.1']
    #allocation7 [shape = 'u8[32768]{0}', space=vmem, size = 0x8000, scoped, tag = 'input window, operand 3, single buffered']
    #allocation8 [shape = 'u8[32768]{0}', space=vmem, size = 0x8000, scoped, tag = 'input window, operand 5, single buffered']
    #allocation9 [shape = 's32[1]{0}', space=sflag, size = 0x4, scoped, tag = 'scoped memory for tpu_custom_call.1']
    #allocation10 [shape = 'u8[2048]{0}', space=vmem, size = 0x800, scoped, tag = 'output window, operand 0, single buffered']
    %12 = vsyncpa [#allocation3], 0
    %13 = vsyncpa [#allocation6], 0
    %14 = vsyncpa [#allocation9], 0
    %15 = vsyncpa [#allocation4], 0
    // Predicated region
    $region2: #{tpu_custom_call.1} parent=1 // pred_check
      _
    $region3: #{tpu_custom_call.1} parent=1 // pred_check_branch
      %17 = sbr.rel (0) target = $region5
    $region4: #{tpu_custom_call.1} parent=1 // pred_region
      %s19 = ssub.s32 64, 64
      %20 = vsyncadd [#allocation3], %s19
      %s22 = sshll.u32 [#allocation2], 4
      %s23 = int_to_ptr.vmem [resolvable:$true] %s22
      %25 = dma.hbm_to_vmem [thread:$0]  %s0, 64, %s23, [#allocation3]
    $region5: #{tpu_custom_call.1} parent=1 // pred_fallthru
      _
    // Predicated region
    $region6: #{tpu_custom_call.1} parent=1 // pred_check
      _
    $region7: #{tpu_custom_call.1} parent=1 // pred_check_branch
      %27 = sbr.rel (0) target = $region9
    $region8: #{tpu_custom_call.1} parent=1 // pred_region
      %s29 = ssub.s32 128, 128
      %30 = vsyncadd [#allocation6], %s29
      %s31 = sshll.u32 [#allocation5], 4
      %s32 = int_to_ptr.vmem [resolvable:$true] %s31
      %37 = dma.hbm_to_vmem [thread:$0]  %s1, 128, %s32, [#allocation6], 64, 64, 4
    $region9: #{tpu_custom_call.1} parent=1 // pred_fallthru
      _
    // Predicated region
    $region10: #{tpu_custom_call.1} parent=1 // pred_check
      _
    $region11: #{tpu_custom_call.1} parent=1 // pred_check_branch
      %39 = sbr.rel (0) target = $region13
    $region12: #{tpu_custom_call.1} parent=1 // pred_region
      _
    $region13: #{tpu_custom_call.1} parent=1 // pred_fallthru
      _
    // Predicated region
    $region14: #{tpu_custom_call.1} parent=1 // pred_check
      _
    $region15: #{tpu_custom_call.1} parent=1 // pred_check_branch
      %41 = sbr.rel (0) target = $region17
    $region16: #{tpu_custom_call.1} parent=1 // pred_region
      %s43 = ssub.s32 1024, 1024
      %44 = vsyncadd [#allocation6], %s43
      %s45 = sshll.u32 [#allocation7], 4
      %s46 = int_to_ptr.vmem [resolvable:$true] %s45
      %51 = dma.hbm_to_vmem [thread:$0]  %s3, 1024, %s46, [#allocation6], 64, 64, 4
    $region17: #{tpu_custom_call.1} parent=1 // pred_fallthru
      _
    // Predicated region
    $region18: #{tpu_custom_call.1} parent=1 // pred_check
      _
    $region19: #{tpu_custom_call.1} parent=1 // pred_check_branch
      %53 = sbr.rel (0) target = $region21
    $region20: #{tpu_custom_call.1} parent=1 // pred_region
      _
    $region21: #{tpu_custom_call.1} parent=1 // pred_fallthru
      _
    // Predicated region
    $region22: #{tpu_custom_call.1} parent=1 // pred_check
      _
    $region23: #{tpu_custom_call.1} parent=1 // pred_check_branch
      %55 = sbr.rel (0) target = $region25
    $region24: #{tpu_custom_call.1} parent=1 // pred_region
      %s57 = ssub.s32 1024, 1024
      %58 = vsyncadd [#allocation9], %s57
      %s59 = sshll.u32 [#allocation8], 4
      %s60 = int_to_ptr.vmem [resolvable:$true] %s59
      %65 = dma.hbm_to_vmem [thread:$0]  %s5, 1024, %s60, [#allocation9], 64, 64, 4
    $region25: #{tpu_custom_call.1} parent=1 // pred_fallthru
      _
    // Predicated region
    $region26: #{tpu_custom_call.1} parent=1 // pred_check
      _
    $region27: #{tpu_custom_call.1} parent=1 // pred_check_branch
      %67 = sbr.rel (0) target = $region29
    $region28: #{tpu_custom_call.1} parent=1 // pred_region
      _
    $region29: #{tpu_custom_call.1} parent=1 // pred_fallthru
      _
    // Predicated region
    $region30: #{tpu_custom_call.1} parent=1 // pred_check
      _
    $region31: #{tpu_custom_call.1} parent=1 // pred_check_branch
      %69 = sbr.rel (0) target = $region33
    $region32: #{tpu_custom_call.1} parent=1 // pred_region
      %70 = dma.done [#allocation3], 64
    $region33: #{tpu_custom_call.1} parent=1 // pred_fallthru
      _
    // Predicated region
    $region34: #{tpu_custom_call.1} parent=1 // pred_check
      _
    $region35: #{tpu_custom_call.1} parent=1 // pred_check_branch
      %72 = sbr.rel (0) target = $region37
    $region36: #{tpu_custom_call.1} parent=1 // pred_region
      %73 = dma.done [#allocation6], 128
    $region37: #{tpu_custom_call.1} parent=1 // pred_fallthru
      _
    // Predicated region
    $region38: #{tpu_custom_call.1} parent=1 // pred_check
      _
    $region39: #{tpu_custom_call.1} parent=1 // pred_check_branch
      %75 = sbr.rel (0) target = $region41
    $region40: #{tpu_custom_call.1} parent=1 // pred_region
      %76 = dma.done [#allocation6], 1024
    $region41: #{tpu_custom_call.1} parent=1 // pred_fallthru
      _
    // Predicated region
    $region42: #{tpu_custom_call.1} parent=1 // pred_check
      _
    $region43: #{tpu_custom_call.1} parent=1 // pred_check_branch
      %78 = sbr.rel (0) target = $region45
    $region44: #{tpu_custom_call.1} parent=1 // pred_region
      %79 = dma.done [#allocation9], 1024
    $region45: #{tpu_custom_call.1} parent=1 // pred_fallthru
      _
    %v81 = vld [vmem:[%s2] sm:$0x1]
    %v82 = vld [vmem:[%s4] sm:$0x1]
    %v83 = vld [vmem:[%s6] sm:$0x1]
    %v84 = vld [vmem:[#allocation2] sm:$0xf]
    %v85 = vld [vmem:[#allocation5] sm:$0xf]
    %v86 = vld [vmem:[#allocation5 + $0x4] sm:$0xf]
    %v88 = vlaneseq
    %v89 = vshrl.u32 %v88, 7
    %v90 = vsub.s32 0, %v89
    %v91 = vrot.slane %v81, %v90
    %v95 = vunpack.c.l.b16 %v85
    %v96 = vunpack.c.l.b16 %v86
    %v97 = vpack.c.b16 %v96, %v95
    %vm99 = vcmask 130048
    %v101 = vsel %vm99, %v84, 0
    %103 = vmatprep.subr.bf16.mxu0 0
    %104 = vmatpush1.bf16.msra.mxu0 %v97
    %105 = vmatprep.subr.bf16.mxu0 0
    %106 = vmatpush1.bf16.msra.mxu0 0
    %107 = vmatprep.subr.bf16.mxu0 0
    %108 = vmatpush1.bf16.msra.mxu0 0
    %109 = vmatprep.subr.bf16.mxu0 0
    %110 = vmatpush1.bf16.msra.mxu0 0
    %111 = vmatprep.subr.bf16.mxu0 0
    %112 = vmatpush1.bf16.msra.mxu0 0
    %113 = vmatprep.subr.bf16.mxu0 0
    %114 = vmatpush1.bf16.msra.mxu0 0
    %115 = vmatprep.subr.bf16.mxu0 0
    %116 = vmatpush1.bf16.msra.mxu0 0
    %117 = vmatprep.subr.bf16.mxu0 0
    %118 = vmatpush1.bf16.msra.mxu0 0
    %119 = vmatprep.subr.bf16.mxu0 0
    %120 = vmatpush1.bf16.msra.mxu0 0
    %121 = vmatprep.subr.bf16.mxu0 0
    %122 = vmatpush1.bf16.msra.mxu0 0
    %123 = vmatprep.subr.bf16.mxu0 0
    %124 = vmatpush1.bf16.msra.mxu0 0
    %125 = vmatprep.subr.bf16.mxu0 0
    %126 = vmatpush1.bf16.msra.mxu0 0
    %127 = vmatprep.subr.bf16.mxu0 0
    %128 = vmatpush1.bf16.msra.mxu0 0
    %129 = vmatprep.subr.bf16.mxu0 0
    %130 = vmatpush1.bf16.msra.mxu0 0
    %131 = vmatprep.subr.bf16.mxu0 0
    %132 = vmatpush1.bf16.msra.mxu0 0
    %133 = vmatprep.subr.bf16.mxu0 0
    %134 = vmatpush1.bf16.msra.mxu0 0
    %135 = vmatprep.mubr.bf16.mxu0 0
    %136 = vmatmul.mubr.bf16.gmra.mrb[0].mxu0 %v101
    %v137 = vpop.f32.mrb[0].mxu0
    %v138 = vadd.f32 %v91, %v137
    %v139 = vpop.f32.mrb[0].mxu0
    %v140 = vpop.f32.mrb[0].mxu0
    %v141 = vpop.f32.mrb[0].mxu0
    %142 = vdwg.mxu0
    %v143 = vtanh.pop %v138
    %v144 = vpack.c.bf16 %v143, %v143
    %v145 = vld [vmem:[#allocation7] sm:$0xf]
    %v146 = vld [vmem:[#allocation7 + $0x4] sm:$0xf]
    %v147 = vld [vmem:[#allocation7 + $0x8] sm:$0xf]
    %v148 = vld [vmem:[#allocation7 + $0xc] sm:$0xf]
    %v149 = vld [vmem:[#allocation7 + $0x10] sm:$0xf]
    %v150 = vld [vmem:[#allocation7 + $0x14] sm:$0xf]
    %v151 = vld [vmem:[#allocation7 + $0x18] sm:$0xf]
    %v152 = vld [vmem:[#allocation7 + $0x1c] sm:$0xf]
    %v153 = vld [vmem:[#allocation7 + $0x20] sm:$0xf]
    %v154 = vld [vmem:[#allocation7 + $0x24] sm:$0xf]
    %v155 = vld [vmem:[#allocation7 + $0x28] sm:$0xf]
    %v156 = vld [vmem:[#allocation7 + $0x2c] sm:$0xf]
    %v157 = vld [vmem:[#allocation7 + $0x30] sm:$0xf]
    %v158 = vld [vmem:[#allocation7 + $0x34] sm:$0xf]
    %v159 = vld [vmem:[#allocation7 + $0x38] sm:$0xf]
    %v160 = vld [vmem:[#allocation7 + $0x3c] sm:$0xf]
    %v162 = vlaneseq
    %v163 = vshrl.u32 %v162, 7
    %v164 = vsub.s32 0, %v163
    %v165 = vrot.slane %v82, %v164
    %v183 = vunpack.c.l.b16 %v145
    %v184 = vunpack.c.l.b16 %v146
    %v185 = vunpack.c.l.b16 %v147
    %v186 = vunpack.c.l.b16 %v148
    %v187 = vunpack.c.l.b16 %v149
    %v188 = vunpack.c.l.b16 %v150
    %v189 = vunpack.c.l.b16 %v151
    %v190 = vunpack.c.l.b16 %v152
    %v191 = vunpack.c.l.b16 %v153
    %v192 = vunpack.c.l.b16 %v154
    %v193 = vunpack.c.l.b16 %v155
    %v194 = vunpack.c.l.b16 %v156
    %v195 = vunpack.c.l.b16 %v157
    %v196 = vunpack.c.l.b16 %v158
    %v197 = vunpack.c.l.b16 %v159
    %v198 = vunpack.c.l.b16 %v160
    %v199 = vpack.c.b16 %v184, %v183
    %v200 = vpack.c.b16 %v186, %v185
    %v201 = vpack.c.b16 %v188, %v187
    %v202 = vpack.c.b16 %v190, %v189
    %v203 = vpack.c.b16 %v192, %v191
    %v204 = vpack.c.b16 %v194, %v193
    %v205 = vpack.c.b16 %v196, %v195
    %v206 = vpack.c.b16 %v198, %v197
    %215 = vmatprep.subr.bf16.mxu0 0
    %216 = vmatpush1.bf16.msra.mxu0 %v199
    %217 = vmatprep.subr.bf16.mxu0 0
    %218 = vmatpush1.bf16.msra.mxu0 %v200
    %219 = vmatprep.subr.bf16.mxu0 0
    %220 = vmatpush1.bf16.msra.mxu0 %v201
    %221 = vmatprep.subr.bf16.mxu0 0
    %222 = vmatpush1.bf16.msra.mxu0 %v202
    %223 = vmatprep.subr.bf16.mxu0 0
    %224 = vmatpush1.bf16.msra.mxu0 %v203
    %225 = vmatprep.subr.bf16.mxu0 0
    %226 = vmatpush1.bf16.msra.mxu0 %v204
    %227 = vmatprep.subr.bf16.mxu0 0
    %228 = vmatpush1.bf16.msra.mxu0 %v205
    %229 = vmatprep.subr.bf16.mxu0 0
    %230 = vmatpush1.bf16.msra.mxu0 %v206
    %231 = vmatprep.subr.bf16.mxu0 0
    %232 = vmatpush1.bf16.msra.mxu0 0
    %233 = vmatprep.subr.bf16.mxu0 0
    %234 = vmatpush1.bf16.msra.mxu0 0
    %235 = vmatprep.subr.bf16.mxu0 0
    %236 = vmatpush1.bf16.msra.mxu0 0
    %237 = vmatprep.subr.bf16.mxu0 0
    %238 = vmatpush1.bf16.msra.mxu0 0
    %239 = vmatprep.subr.bf16.mxu0 0
    %240 = vmatpush1.bf16.msra.mxu0 0
    %241 = vmatprep.subr.bf16.mxu0 0
    %242 = vmatpush1.bf16.msra.mxu0 0
    %243 = vmatprep.subr.bf16.mxu0 0
    %244 = vmatpush1.bf16.msra.mxu0 0
    %245 = vmatprep.subr.bf16.mxu0 0
    %246 = vmatpush1.bf16.msra.mxu0 0
    %247 = vmatprep.mubr.bf16.mxu0 0
    %248 = vmatmul.mubr.bf16.gmra.mrb[0].mxu0 %v144
    %v249 = vpop.f32.mrb[0].mxu0
    %v250 = vadd.f32 %v165, %v249
    %v251 = vpop.f32.mrb[0].mxu0
    %v252 = vpop.f32.mrb[0].mxu0
    %v253 = vpop.f32.mrb[0].mxu0
    %254 = vdwg.mxu0
    %v255 = vtanh.pop %v250
    %v256 = vpack.c.bf16 %v255, %v255
    %v257 = vld [vmem:[#allocation8] sm:$0xf]
    %v258 = vld [vmem:[#allocation8 + $0x4] sm:$0xf]
    %v259 = vld [vmem:[#allocation8 + $0x8] sm:$0xf]
    %v260 = vld [vmem:[#allocation8 + $0xc] sm:$0xf]
    %v261 = vld [vmem:[#allocation8 + $0x10] sm:$0xf]
    %v262 = vld [vmem:[#allocation8 + $0x14] sm:$0xf]
    %v263 = vld [vmem:[#allocation8 + $0x18] sm:$0xf]
    %v264 = vld [vmem:[#allocation8 + $0x1c] sm:$0xf]
    %v265 = vld [vmem:[#allocation8 + $0x20] sm:$0xf]
    %v266 = vld [vmem:[#allocation8 + $0x24] sm:$0xf]
    %v267 = vld [vmem:[#allocation8 + $0x28] sm:$0xf]
    %v268 = vld [vmem:[#allocation8 + $0x2c] sm:$0xf]
    %v269 = vld [vmem:[#allocation8 + $0x30] sm:$0xf]
    %v270 = vld [vmem:[#allocation8 + $0x34] sm:$0xf]
    %v271 = vld [vmem:[#allocation8 + $0x38] sm:$0xf]
    %v272 = vld [vmem:[#allocation8 + $0x3c] sm:$0xf]
    %v274 = vlaneseq
    %v275 = vshrl.u32 %v274, 7
    %v276 = vsub.s32 0, %v275
    %v277 = vrot.slane %v83, %v276
    %v295 = vunpack.c.l.b16 %v257
    %v296 = vunpack.c.l.b16 %v258
    %v297 = vunpack.c.l.b16 %v259
    %v298 = vunpack.c.l.b16 %v260
    %v299 = vunpack.c.l.b16 %v261
    %v300 = vunpack.c.l.b16 %v262
    %v301 = vunpack.c.l.b16 %v263
    %v302 = vunpack.c.l.b16 %v264
    %v303 = vunpack.c.l.b16 %v265
    %v304 = vunpack.c.l.b16 %v266
    %v305 = vunpack.c.l.b16 %v267
    %v306 = vunpack.c.l.b16 %v268
    %v307 = vunpack.c.l.b16 %v269
    %v308 = vunpack.c.l.b16 %v270
    %v309 = vunpack.c.l.b16 %v271
    %v310 = vunpack.c.l.b16 %v272
    %v311 = vpack.c.b16 %v296, %v295
    %v312 = vpack.c.b16 %v298, %v297
    %v313 = vpack.c.b16 %v300, %v299
    %v314 = vpack.c.b16 %v302, %v301
    %v315 = vpack.c.b16 %v304, %v303
    %v316 = vpack.c.b16 %v306, %v305
    %v317 = vpack.c.b16 %v308, %v307
    %v318 = vpack.c.b16 %v310, %v309
    %327 = vmatprep.subr.bf16.mxu0 0
    %328 = vmatpush1.bf16.msra.mxu0 %v311
    %329 = vmatprep.subr.bf16.mxu0 0
    %330 = vmatpush1.bf16.msra.mxu0 %v312
    %331 = vmatprep.subr.bf16.mxu0 0
    %332 = vmatpush1.bf16.msra.mxu0 %v313
    %333 = vmatprep.subr.bf16.mxu0 0
    %334 = vmatpush1.bf16.msra.mxu0 %v314
    %335 = vmatprep.subr.bf16.mxu0 0
    %336 = vmatpush1.bf16.msra.mxu0 %v315
    %337 = vmatprep.subr.bf16.mxu0 0
    %338 = vmatpush1.bf16.msra.mxu0 %v316
    %339 = vmatprep.subr.bf16.mxu0 0
    %340 = vmatpush1.bf16.msra.mxu0 %v317
    %341 = vmatprep.subr.bf16.mxu0 0
    %342 = vmatpush1.bf16.msra.mxu0 %v318
    %343 = vmatprep.subr.bf16.mxu0 0
    %344 = vmatpush1.bf16.msra.mxu0 0
    %345 = vmatprep.subr.bf16.mxu0 0
    %346 = vmatpush1.bf16.msra.mxu0 0
    %347 = vmatprep.subr.bf16.mxu0 0
    %348 = vmatpush1.bf16.msra.mxu0 0
    %349 = vmatprep.subr.bf16.mxu0 0
    %350 = vmatpush1.bf16.msra.mxu0 0
    %351 = vmatprep.subr.bf16.mxu0 0
    %352 = vmatpush1.bf16.msra.mxu0 0
    %353 = vmatprep.subr.bf16.mxu0 0
    %354 = vmatpush1.bf16.msra.mxu0 0
    %355 = vmatprep.subr.bf16.mxu0 0
    %356 = vmatpush1.bf16.msra.mxu0 0
    %357 = vmatprep.subr.bf16.mxu0 0
    %358 = vmatpush1.bf16.msra.mxu0 0
    %359 = vmatprep.mubr.bf16.mxu0 0
    %360 = vmatmul.mubr.bf16.gmra.mrb[0].mxu0 %v256
    %v361 = vpop.f32.mrb[0].mxu0
    %v362 = vadd.f32 %v277, %v361
    %v363 = vpop.f32.mrb[0].mxu0
    %v364 = vpop.f32.mrb[0].mxu0
    %v365 = vpop.f32.mrb[0].mxu0
    %366 = vdwg.mxu0
    %v367 = vpack.c.bf16 %v362, %v362
    %368 = vst [vmem:[#allocation10] sm:$0xf] %v367
    // Predicated region
    $region46: #{tpu_custom_call.1} parent=1 // pred_check
      _
    $region47: #{tpu_custom_call.1} parent=1 // pred_check_branch
      %370 = sbr.rel (0) target = $region49
    $region48: #{tpu_custom_call.1} parent=1 // pred_region
      %s372 = ssub.s32 64, 64
      %373 = vsyncadd [#allocation4], %s372
      %s375 = sshll.u32 [#allocation10], 4
      %s376 = int_to_ptr.vmem [resolvable:$true] %s375
      %378 = dma.vmem_to_hbm [thread:$0]  %s376, 64, %s7, [#allocation4]
    $region49: #{tpu_custom_call.1} parent=1 // pred_fallthru
      _
    // Predicated region
    $region50: #{tpu_custom_call.1} parent=1 // pred_check
      _
    $region51: #{tpu_custom_call.1} parent=1 // pred_check_branch
      %380 = sbr.rel (0) target = $region53
    $region52: #{tpu_custom_call.1} parent=1 // pred_region
      %381 = dma.done [#allocation4], 64
    $region53: #{tpu_custom_call.1} parent=1 // pred_fallthru
      _
    %382 = vsyncpa [#allocation3], 1
    %383 = vsyncpa [#allocation6], 1
    %384 = vsyncpa [#allocation9], 1
    %385 = vsyncpa [#allocation4], 1

</llo_original>
